<compile_context>
chip_gen: v6e
topology: v6e:2x2x1
jax: 0.10.0
libtpu: 0.0.40
codegen_flags: <defaults>
</compile_context>

<pallas_src>
from functools import partial

import jax
import jax.numpy as jnp
from jax.experimental import pallas as pl
from jax.experimental.pallas import tpu as pltpu

LANE = 128
SUBLANE = 8
TILE_B_CAP = 2048  # rows per grid step (multiple of 8)


def _round_up(x, m):
    return (x + m - 1) // m * m


def _actor_kernel(obs_ref, w1_ref, b1_ref, w2_ref, b2_ref, w3_ref, b3_ref,
                  mu_ref):
    """Fused MLP (Linear->ReLU->Linear->ReLU->Linear) + tanh.

    One batch tile per program; all weights/biases stay resident in VMEM
    (constant index_maps). Matmuls run bf16 x bf16 on the MXU with f32
    accumulation; bias/ReLU/tanh stay f32.
    """
    x = obs_ref[...].astype(jnp.bfloat16)

    # Layer 1: Linear + ReLU
    h = jnp.dot(x, w1_ref[...], preferred_element_type=jnp.float32) + b1_ref[...]
    h = jnp.maximum(h, 0.0)

    # Layer 2: Linear + ReLU
    h = jnp.dot(h.astype(jnp.bfloat16), w2_ref[...],
                preferred_element_type=jnp.float32) + b2_ref[...]
    h = jnp.maximum(h, 0.0)

    # Output layer: Linear + tanh
    mu = jnp.dot(h.astype(jnp.bfloat16), w3_ref[...],
                 preferred_element_type=jnp.float32) + b3_ref[...]
    mu_ref[...] = jnp.tanh(mu)


def init_params(key, obs_dim, action_dim, hidden_dim):
    """Deterministic synthetic init for the 3-Linear MLP (hidden_depth=2)."""
    k1, k2, k3 = jax.random.split(key, 3)

    def linear(k, fan_in, fan_out):
        w = jax.random.normal(k, (fan_in, fan_out), jnp.float32) / jnp.sqrt(fan_in)
        b = jnp.zeros((1, fan_out), jnp.float32)
        return w, b

    w1, b1 = linear(k1, obs_dim, hidden_dim)
    w2, b2 = linear(k2, hidden_dim, hidden_dim)
    w3, b3 = linear(k3, hidden_dim, action_dim)
    return (w1, b1, w2, b2, w3, b3)


def pad_params(params):
    """One-time weight prep:

    * hidden / action feature dims are zero-padded to 128 lanes (lane-dense
      loads / stores, full MXU columns);
    * the obs (contraction) dim of w1 is kept at its TRUE size — obs is not
      lane-padded anymore;
    * weights are cast to bf16 (MXU-native), biases stay f32.

    Zero-padded columns/rows contribute exactly 0 through bias-0 -> ReLU -> 0.
    """
    w1, b1, w2, b2, w3, b3 = params
    obs_dim = w1.shape[0]
    hid_pad = _round_up(w1.shape[1], LANE)
    act_pad = _round_up(w3.shape[1], LANE)

    def pad_w(w, rows, cols):
        out = jnp.zeros((rows, cols), jnp.float32)
        out = out.at[: w.shape[0], : w.shape[1]].set(w)
        return out.astype(jnp.bfloat16)

    def pad_b(b, cols):
        return jnp.zeros((1, cols), jnp.float32).at[:, : b.shape[1]].set(b)

    return (
        pad_w(w1, obs_dim, hid_pad), pad_b(b1, hid_pad),
        pad_w(w2, hid_pad, hid_pad), pad_b(b2, hid_pad),
        pad_w(w3, hid_pad, act_pad), pad_b(b3, act_pad),
    )


@partial(jax.jit, static_argnames=("action_dim", "tile_b"))
def ddpg_actor_forward(obs, padded_params, std, *, action_dim, tile_b=None):
    """DDPGActor.forward: returns (mu, std_arr), the parameters of
    utils.TruncatedNormal(mu, std).

    The whole wrapper is jitted so the batch pad, the output slice and the
    std broadcast fuse into the surrounding graph (matters at small B).
    """
    # TODO(synk): TruncatedNormal distribution object (sampling / log_prob)
    # has no Pallas equivalent here; we return its parameters (mu, std).
    w1, b1, w2, b2, w3, b3 = padded_params
    B, obs_dim = obs.shape
    hid_pad = w1.shape[1]
    act_pad = w3.shape[1]

    # Pad the batch only to the 8-row sublane multiple (NOT to a full tile);
    # the feature axis stays at the true obs_dim (no 24 -> 128 lane padding).
    b_pad = _round_up(B, SUBLANE)
    obs_p = obs if b_pad == B else jnp.pad(obs, ((0, b_pad - B), (0, 0)))

    if tile_b is None:
        tile_b = min(TILE_B_CAP, b_pad)

    # Pallas masks the partial last block (b_pad and tile_b are multiples of 8).
    grid = (pl.cdiv(b_pad, tile_b),)

    mu_pad = pl.pallas_call(
        _actor_kernel,
        out_shape=jax.ShapeDtypeStruct((b_pad, act_pad), jnp.float32),
        grid=grid,
        in_specs=[
            # obs tile: true feature width (== full last dim, so legal).
            pl.BlockSpec((tile_b, obs_dim), lambda i: (i, 0)),
            # Weights / biases: constant index_map -> fetched once, resident.
            pl.BlockSpec((obs_dim, hid_pad), lambda i: (0, 0)),  # w1
            pl.BlockSpec((1, hid_pad), lambda i: (0, 0)),        # b1
            pl.BlockSpec((hid_pad, hid_pad), lambda i: (0, 0)),  # w2
            pl.BlockSpec((1, hid_pad), lambda i: (0, 0)),        # b2
            pl.BlockSpec((hid_pad, act_pad), lambda i: (0, 0)),  # w3
            pl.BlockSpec((1, act_pad), lambda i: (0, 0)),        # b3
        ],
        out_specs=pl.BlockSpec((tile_b, act_pad), lambda i: (i, 0)),
        compiler_params=pltpu.CompilerParams(
            dimension_semantics=("parallel",)),
    )(obs_p, w1, b1, w2, b2, w3, b3)

    mu = mu_pad[:B, :action_dim]
    # std = torch.ones_like(mu) * std — shape-only constant; fused XLA
    # broadcast in the wrapper instead of a kernel store.
    std_arr = jnp.full((B, action_dim), std, jnp.float32)
    return mu, std_arr


def reference_forward(obs, params, std):
    w1, b1, w2, b2, w3, b3 = params
    h = jnp.maximum(obs @ w1 + b1, 0.0)
    h = jnp.maximum(h @ w2 + b2, 0.0)
    mu = jnp.tanh(h @ w3 + b3)
    return mu, jnp.ones_like(mu) * std


if __name__ == "__main__":
    # Small shapes consistent with the module: obs_dim=24, hidden_dim=32,
    # action_dim=6, hidden_depth=2, batch=8.
    B, OBS_DIM, HIDDEN_DIM, ACTION_DIM = 8, 24, 32, 6
    STD = 0.2

    key = jax.random.PRNGKey(0)
    key_obs, key_params = jax.random.split(key)

    obs = jax.random.normal(key_obs, (B, OBS_DIM), jnp.float32)
    params = init_params(key_params, OBS_DIM, ACTION_DIM, HIDDEN_DIM)
    padded_params = pad_params(params)   # one-time lane-pad + bf16 cast

    mu, std_arr = ddpg_actor_forward(obs, padded_params, STD,
                                     action_dim=ACTION_DIM)
    mu = jax.block_until_ready(mu)
    std_arr = jax.block_until_ready(std_arr)

    mu_ref, std_ref = reference_forward(obs, params, STD)
    assert mu.shape == (B, ACTION_DIM) and std_arr.shape == (B, ACTION_DIM)
    # Tolerance loosened vs. pure-f32 because weights/activations feeding the
    # MXU are bf16 (accumulation and tanh stay f32).
    assert jnp.allclose(mu, mu_ref, atol=2e-2, rtol=2e-2)
    assert jnp.allclose(std_arr, std_ref, atol=1e-6)

    print("KERNEL_OK")
</pallas_src>

<mosaic_0001>
module attributes {stable_mosaic.version = 11 : i64} {
  func.func @_actor_kernel(%arg0: i32, %arg1: memref<8x24xf32, #tpu.memory_space<vmem>>, %arg2: memref<24x128xbf16, #tpu.memory_space<vmem>>, %arg3: memref<1x128xf32, #tpu.memory_space<vmem>>, %arg4: memref<128x128xbf16, #tpu.memory_space<vmem>>, %arg5: memref<1x128xf32, #tpu.memory_space<vmem>>, %arg6: memref<128x128xbf16, #tpu.memory_space<vmem>>, %arg7: memref<1x128xf32, #tpu.memory_space<vmem>>, %arg8: memref<8x128xf32, #tpu.memory_space<vmem>>) attributes {dimension_semantics = [#tpu.dimension_semantics<parallel>], iteration_bounds = array<i64: 1>, scalar_prefetch = 0 : i64, scratch_operands = 0 : i64, tpu.core_type = #tpu.core_type<tc>, window_params = [{transform_indices = @transform_0, window_bounds = array<i64: 8, 24>}, {pipeline_mode = #tpu.pipeline_mode<synchronous>, transform_indices = @transform_1, window_bounds = array<i64: 24, 128>}, {pipeline_mode = #tpu.pipeline_mode<synchronous>, transform_indices = @transform_2, window_bounds = array<i64: 1, 128>}, {pipeline_mode = #tpu.pipeline_mode<synchronous>, transform_indices = @transform_3, window_bounds = array<i64: 128, 128>}, {pipeline_mode = #tpu.pipeline_mode<synchronous>, transform_indices = @transform_4, window_bounds = array<i64: 1, 128>}, {pipeline_mode = #tpu.pipeline_mode<synchronous>, transform_indices = @transform_5, window_bounds = array<i64: 128, 128>}, {pipeline_mode = #tpu.pipeline_mode<synchronous>, transform_indices = @transform_6, window_bounds = array<i64: 1, 128>}, {transform_indices = @transform_7, window_bounds = array<i64: 8, 128>}]} {
    %c0 = arith.constant 0 : index
    %c0_0 = arith.constant 0 : index
    %0 = vector.load %arg1[%c0, %c0_0] : memref<8x24xf32, #tpu.memory_space<vmem>>, vector<8x24xf32>
    %1 = arith.truncf %0 : vector<8x24xf32> to vector<8x24xbf16>
    %c0_1 = arith.constant 0 : index
    %c0_2 = arith.constant 0 : index
    %2 = vector.load %arg2[%c0_1, %c0_2] : memref<24x128xbf16, #tpu.memory_space<vmem>>, vector<24x128xbf16>
    %cst = arith.constant dense<0.000000e+00> : vector<8x128xf32>
    %3 = tpu.matmul %1, %2, %cst {dimension_numbers = #tpu.dot_dimension_numbers<[1], [0], [0], [1], [0, 0, 1, 1], [], []>} : vector<8x24xbf16>, vector<24x128xbf16>, vector<8x128xf32> -> vector<8x128xf32>
    %c0_3 = arith.constant 0 : index
    %c0_4 = arith.constant 0 : index
    %4 = vector.load %arg3[%c0_3, %c0_4] : memref<1x128xf32, #tpu.memory_space<vmem>>, vector<1x128xf32>
    %5 = vector.broadcast %4 : vector<1x128xf32> to vector<8x128xf32>
    %6 = arith.addf %3, %5 : vector<8x128xf32>
    %cst_5 = arith.constant 0.000000e+00 : f32
    %7 = vector.broadcast %cst_5 : f32 to vector<8x128xf32>
    %8 = arith.maximumf %6, %7 : vector<8x128xf32>
    %9 = arith.truncf %8 : vector<8x128xf32> to vector<8x128xbf16>
    %c0_6 = arith.constant 0 : index
    %c0_7 = arith.constant 0 : index
    %10 = vector.load %arg4[%c0_6, %c0_7] : memref<128x128xbf16, #tpu.memory_space<vmem>>, vector<128x128xbf16>
    %cst_8 = arith.constant dense<0.000000e+00> : vector<8x128xf32>
    %11 = tpu.matmul %9, %10, %cst_8 {dimension_numbers = #tpu.dot_dimension_numbers<[1], [0], [0], [1], [0, 0, 1, 1], [], []>} : vector<8x128xbf16>, vector<128x128xbf16>, vector<8x128xf32> -> vector<8x128xf32>
    %c0_9 = arith.constant 0 : index
    %c0_10 = arith.constant 0 : index
    %12 = vector.load %arg5[%c0_9, %c0_10] : memref<1x128xf32, #tpu.memory_space<vmem>>, vector<1x128xf32>
    %13 = vector.broadcast %12 : vector<1x128xf32> to vector<8x128xf32>
    %14 = arith.addf %11, %13 : vector<8x128xf32>
    %cst_11 = arith.constant 0.000000e+00 : f32
    %15 = vector.broadcast %cst_11 : f32 to vector<8x128xf32>
    %16 = arith.maximumf %14, %15 : vector<8x128xf32>
    %17 = arith.truncf %16 : vector<8x128xf32> to vector<8x128xbf16>
    %c0_12 = arith.constant 0 : index
    %c0_13 = arith.constant 0 : index
    %18 = vector.load %arg6[%c0_12, %c0_13] : memref<128x128xbf16, #tpu.memory_space<vmem>>, vector<128x128xbf16>
    %cst_14 = arith.constant dense<0.000000e+00> : vector<8x128xf32>
    %19 = tpu.matmul %17, %18, %cst_14 {dimension_numbers = #tpu.dot_dimension_numbers<[1], [0], [0], [1], [0, 0, 1, 1], [], []>} : vector<8x128xbf16>, vector<128x128xbf16>, vector<8x128xf32> -> vector<8x128xf32>
    %c0_15 = arith.constant 0 : index
    %c0_16 = arith.constant 0 : index
    %20 = vector.load %arg7[%c0_15, %c0_16] : memref<1x128xf32, #tpu.memory_space<vmem>>, vector<1x128xf32>
    %21 = vector.broadcast %20 : vector<1x128xf32> to vector<8x128xf32>
    %22 = arith.addf %19, %21 : vector<8x128xf32>
    %23 = math.tanh %22 : vector<8x128xf32>
    %c0_17 = arith.constant 0 : index
    %c0_18 = arith.constant 0 : index
    %24 = vector.load %arg8[%c0_17, %c0_18] : memref<8x128xf32, #tpu.memory_space<vmem>>, vector<8x128xf32>
    tpu.vector_store %arg8[%c0_17, %c0_18], %23 {strides = array<i32>} : memref<8x128xf32, #tpu.memory_space<vmem>>, vector<8x128xf32>,
    return
  }
  func.func @transform_0(%arg0: i32) -> (i32, i32) {
    %c0_i32 = arith.constant 0 : i32
    %c0_i32_0 = arith.constant 0 : i32
    return %arg0, %c0_i32 : i32, i32
  }
  func.func @transform_1(%arg0: i32) -> (i32, i32) {
    %c0_i32 = arith.constant 0 : i32
    %c0_i32_0 = arith.constant 0 : i32
    %c0_i32_1 = arith.constant 0 : i32
    return %c0_i32, %c0_i32_0 : i32, i32
  }
  func.func @transform_2(%arg0: i32) -> (i32, i32) {
    %c0_i32 = arith.constant 0 : i32
    %c0_i32_0 = arith.constant 0 : i32
    %c0_i32_1 = arith.constant 0 : i32
    return %c0_i32, %c0_i32_0 : i32, i32
  }
  func.func @transform_3(%arg0: i32) -> (i32, i32) {
    %c0_i32 = arith.constant 0 : i32
    %c0_i32_0 = arith.constant 0 : i32
    %c0_i32_1 = arith.constant 0 : i32
    return %c0_i32, %c0_i32_0 : i32, i32
  }
  func.func @transform_4(%arg0: i32) -> (i32, i32) {
    %c0_i32 = arith.constant 0 : i32
    %c0_i32_0 = arith.constant 0 : i32
    %c0_i32_1 = arith.constant 0 : i32
    return %c0_i32, %c0_i32_0 : i32, i32
  }
  func.func @transform_5(%arg0: i32) -> (i32, i32) {
    %c0_i32 = arith.constant 0 : i32
    %c0_i32_0 = arith.constant 0 : i32
    %c0_i32_1 = arith.constant 0 : i32
    return %c0_i32, %c0_i32_0 : i32, i32
  }
  func.func @transform_6(%arg0: i32) -> (i32, i32) {
    %c0_i32 = arith.constant 0 : i32
    %c0_i32_0 = arith.constant 0 : i32
    %c0_i32_1 = arith.constant 0 : i32
    return %c0_i32, %c0_i32_0 : i32, i32
  }
  func.func @transform_7(%arg0: i32) -> (i32, i32) {
    %c0_i32 = arith.constant 0 : i32
    %c0_i32_0 = arith.constant 0 : i32
    return %arg0, %c0_i32 : i32, i32
  }
}

</mosaic_0001>

<llo_original>
// kernel: ddpg_actor_forward.1
$region0: #{ddpg_actor_forward.1}
  #allocation0 [shape = 'u32[]', space=smem, size = 0x4, offset = 0x4, fixed_abs, tag = 'smem constant byte address 0x4 - core index']
  #allocation1 [shape = 'u32[144,128]{1,0:T(1,128)}', space=vmem, size = 0x12000, scoped, tag = 'internal scratch']
  %s0 = inlined_call_operand.hbm [shape: f32[8,24], index: 0, kind: input, shape index: {}]
  %s1 = inlined_call_operand.vmem [shape: bf16[24,128], index: 1, kind: input, shape index: {}]
  %s2 = inlined_call_operand.vmem [shape: f32[1,128], index: 2, kind: input, shape index: {}]
  %s3 = inlined_call_operand.hbm [shape: bf16[128,128], index: 3, kind: input, shape index: {}]
  %s4 = inlined_call_operand.vmem [shape: f32[1,128], index: 4, kind: input, shape index: {}]
  %s5 = inlined_call_operand.hbm [shape: bf16[128,128], index: 5, kind: input, shape index: {}]
  %s6 = inlined_call_operand.vmem [shape: f32[1,128], index: 6, kind: input, shape index: {}]
  %s7 = inlined_call_operand.hbm [shape: f32[8,128], index: 7, kind: output, shape index: {}]
  %s8 = sld [smem:[#allocation0]]
  $region50: #{ddpg_actor_forward.1} parent=0
    _
  %s10 = ssub.s32 1, %s8
  %s11 = scalar_select 0, %s10, %s8
  $region1: #{ddpg_actor_forward.1} parent=0
    #allocation2 [shape = 'u8[4096]{0}', space=vmem, size = 0x1000, scoped, tag = 'input window, operand 0, single buffered']
    #allocation3 [shape = 's32[1]{0}', space=sflag, size = 0x4, scoped, tag = 'scoped memory for ddpg_actor_forward.1']
    #allocation4 [shape = 's32[1]{0}', space=sflag, size = 0x4, scoped, tag = 'scoped memory for ddpg_actor_forward.1']
    #allocation5 [shape = 'u8[32768]{0}', space=vmem, size = 0x8000, scoped, tag = 'input window, operand 3, single buffered']
    #allocation6 [shape = 's32[1]{0}', space=sflag, size = 0x4, scoped, tag = 'scoped memory for ddpg_actor_forward.1']
    #allocation7 [shape = 'u8[32768]{0}', space=vmem, size = 0x8000, scoped, tag = 'input window, operand 5, single buffered']
    #allocation8 [shape = 'u8[4096]{0}', space=vmem, size = 0x1000, scoped, tag = 'output window, operand 0, single buffered']
    %12 = vsyncpa [#allocation3], 0
    %13 = vsyncpa [#allocation6], 0
    %14 = vsyncpa [#allocation4], 0
    // Predicated region
    $region2: #{ddpg_actor_forward.1} parent=1 // pred_check
      _
    $region3: #{ddpg_actor_forward.1} parent=1 // pred_check_branch
      %16 = sbr.rel (0) target = $region5
    $region4: #{ddpg_actor_forward.1} parent=1 // pred_region
      %s18 = ssub.s32 128, 128
      %19 = vsyncadd [#allocation3], %s18
      %s21 = sshll.u32 [#allocation2], 4
      %s22 = int_to_ptr.vmem [resolvable:$true] %s21
      %24 = dma.hbm_to_vmem [thread:$0]  %s0, 128, %s22, [#allocation3]
    $region5: #{ddpg_actor_forward.1} parent=1 // pred_fallthru
      _
    // Predicated region
    $region6: #{ddpg_actor_forward.1} parent=1 // pred_check
      _
    $region7: #{ddpg_actor_forward.1} parent=1 // pred_check_branch
      %26 = sbr.rel (0) target = $region9
    $region8: #{ddpg_actor_forward.1} parent=1 // pred_region
      _
    $region9: #{ddpg_actor_forward.1} parent=1 // pred_fallthru
      _
    // Predicated region
    $region10: #{ddpg_actor_forward.1} parent=1 // pred_check
      _
    $region11: #{ddpg_actor_forward.1} parent=1 // pred_check_branch
      %28 = sbr.rel (0) target = $region13
    $region12: #{ddpg_actor_forward.1} parent=1 // pred_region
      _
    $region13: #{ddpg_actor_forward.1} parent=1 // pred_fallthru
      _
    // Predicated region
    $region14: #{ddpg_actor_forward.1} parent=1 // pred_check
      _
    $region15: #{ddpg_actor_forward.1} parent=1 // pred_check_branch
      %30 = sbr.rel (0) target = $region17
    $region16: #{ddpg_actor_forward.1} parent=1 // pred_region
      %s32 = ssub.s32 1024, 1024
      %33 = vsyncadd [#allocation6], %s32
      %s34 = sshll.u32 [#allocation5], 4
      %s35 = int_to_ptr.vmem [resolvable:$true] %s34
      %40 = dma.hbm_to_vmem [thread:$0]  %s3, 1024, %s35, [#allocation6], 64, 64, 4
    $region17: #{ddpg_actor_forward.1} parent=1 // pred_fallthru
      _
    // Predicated region
    $region18: #{ddpg_actor_forward.1} parent=1 // pred_check
      _
    $region19: #{ddpg_actor_forward.1} parent=1 // pred_check_branch
      %42 = sbr.rel (0) target = $region21
    $region20: #{ddpg_actor_forward.1} parent=1 // pred_region
      _
    $region21: #{ddpg_actor_forward.1} parent=1 // pred_fallthru
      _
    // Predicated region
    $region22: #{ddpg_actor_forward.1} parent=1 // pred_check
      _
    $region23: #{ddpg_actor_forward.1} parent=1 // pred_check_branch
      %44 = sbr.rel (0) target = $region25
    $region24: #{ddpg_actor_forward.1} parent=1 // pred_region
      %s46 = ssub.s32 1024, 1024
      %47 = vsyncadd [#allocation6], %s46
      %s48 = sshll.u32 [#allocation7], 4
      %s49 = int_to_ptr.vmem [resolvable:$true] %s48
      %54 = dma.hbm_to_vmem [thread:$0]  %s5, 1024, %s49, [#allocation6], 64, 64, 4
    $region25: #{ddpg_actor_forward.1} parent=1 // pred_fallthru
      _
    // Predicated region
    $region26: #{ddpg_actor_forward.1} parent=1 // pred_check
      _
    $region27: #{ddpg_actor_forward.1} parent=1 // pred_check_branch
      %56 = sbr.rel (0) target = $region29
    $region28: #{ddpg_actor_forward.1} parent=1 // pred_region
      _
    $region29: #{ddpg_actor_forward.1} parent=1 // pred_fallthru
      _
    // Predicated region
    $region30: #{ddpg_actor_forward.1} parent=1 // pred_check
      _
    $region31: #{ddpg_actor_forward.1} parent=1 // pred_check_branch
      %58 = sbr.rel (0) target = $region33
    $region32: #{ddpg_actor_forward.1} parent=1 // pred_region
      %59 = dma.done [#allocation3], 128
    $region33: #{ddpg_actor_forward.1} parent=1 // pred_fallthru
      _
    // Predicated region
    $region34: #{ddpg_actor_forward.1} parent=1 // pred_check
      _
    $region35: #{ddpg_actor_forward.1} parent=1 // pred_check_branch
      %61 = sbr.rel (0) target = $region37
    $region36: #{ddpg_actor_forward.1} parent=1 // pred_region
      %62 = dma.done [#allocation6], 1024
    $region37: #{ddpg_actor_forward.1} parent=1 // pred_fallthru
      _
    // Predicated region
    $region38: #{ddpg_actor_forward.1} parent=1 // pred_check
      _
    $region39: #{ddpg_actor_forward.1} parent=1 // pred_check_branch
      %64 = sbr.rel (0) target = $region41
    $region40: #{ddpg_actor_forward.1} parent=1 // pred_region
      %65 = dma.done [#allocation6], 1024
    $region41: #{ddpg_actor_forward.1} parent=1 // pred_fallthru
      _
    %v67 = vld [vmem:[#allocation2] sm:$0xff]
    %v68 = vpack.c.bf16 %v67, %v67
    %v69 = vld [vmem:[%s1] sm:$0xf]
    %v70 = vld [vmem:[%s1 + $0x4] sm:$0xf]
    %v71 = vld [vmem:[%s1 + $0x8] sm:$0xf]
    %v72 = vld [vmem:[%s2] sm:$0x1]
    %v74 = vlaneseq
    %v75 = vshrl.u32 %v74, 7
    %v76 = vsub.s32 0, %v75
    %v77 = vrot.slane %v72, %v76
    %v82 = vunpack.c.l.b16 %v69
    %v83 = vunpack.c.l.b16 %v70
    %v84 = vunpack.c.l.b16 %v71
    %v85 = vpack.c.b16 %v83, %v82
    %v86 = vpack.c.b16 %v84, %v84
    %vm88 = vcmask 195584
    %v90 = vsel %vm88, %v68, 0
    %vm92 = vcmask 1043456
    %v94 = vsel %vm92, %v86, 0
    %96 = vmatprep.subr.bf16.mxu0 0
    %97 = vmatpush1.bf16.msra.mxu0 0
    %98 = vmatprep.subr.bf16.mxu0 0
    %99 = vmatpush1.bf16.msra.mxu0 0
    %100 = vmatprep.subr.bf16.mxu0 0
    %101 = vmatpush1.bf16.msra.mxu0 0
    %102 = vmatprep.subr.bf16.mxu0 0
    %103 = vmatpush1.bf16.msra.mxu0 0
    %104 = vmatprep.subr.bf16.mxu0 0
    %105 = vmatpush1.bf16.msra.mxu0 0
    %106 = vmatprep.subr.bf16.mxu0 0
    %107 = vmatpush1.bf16.msra.mxu0 0
    %108 = vmatprep.subr.bf16.mxu0 0
    %109 = vmatpush1.bf16.msra.mxu0 %v94
    %110 = vmatprep.subr.bf16.mxu0 0
    %111 = vmatpush1.bf16.msra.mxu0 %v85
    %112 = vmatprep.subr.bf16.mxu0 0
    %113 = vmatpush2.bf16.msra.mxu0 0
    %114 = vmatprep.subr.bf16.mxu0 0
    %115 = vmatpush2.bf16.msra.mxu0 0
    %116 = vmatprep.subr.bf16.mxu0 0
    %117 = vmatpush2.bf16.msra.mxu0 0
    %118 = vmatprep.subr.bf16.mxu0 0
    %119 = vmatpush2.bf16.msra.mxu0 0
    %120 = vmatprep.subr.bf16.mxu0 0
    %121 = vmatpush2.bf16.msra.mxu0 0
    %122 = vmatprep.subr.bf16.mxu0 0
    %123 = vmatpush2.bf16.msra.mxu0 0
    %124 = vmatprep.subr.bf16.mxu0 0
    %125 = vmatpush2.bf16.msra.mxu0 0
    %126 = vmatprep.subr.bf16.mxu0 0
    %127 = vmatpush2.bf16.msra.mxu0 0
    %128 = vmatprep.mubr.bf16.mxu0 0
    %129 = vmatmul.mubr.bf16.gmra.mxu0 %v90
    %v130 = vpop.f32.mrf.mxu0
    %v131 = vadd.f32 %v77, %v130
    %v132 = vpop.f32.mrf.mxu0
    %v133 = vpop.f32.mrf.mxu0
    %v134 = vpop.f32.mrf.mxu0
    %135 = vdwg.mxu0
    %v136 = vmax.f32 %v131, 0.0
    %v137 = vpack.c.bf16 %v136, %v136
    %v138 = vld [vmem:[#allocation5] sm:$0xf]
    %v139 = vld [vmem:[#allocation5 + $0x4] sm:$0xf]
    %v140 = vld [vmem:[#allocation5 + $0x8] sm:$0xf]
    %v141 = vld [vmem:[#allocation5 + $0xc] sm:$0xf]
    %v142 = vld [vmem:[#allocation5 + $0x10] sm:$0xf]
    %v143 = vld [vmem:[#allocation5 + $0x14] sm:$0xf]
    %v144 = vld [vmem:[#allocation5 + $0x18] sm:$0xf]
    %v145 = vld [vmem:[#allocation5 + $0x1c] sm:$0xf]
    %v146 = vld [vmem:[#allocation5 + $0x20] sm:$0xf]
    %v147 = vld [vmem:[#allocation5 + $0x24] sm:$0xf]
    %v148 = vld [vmem:[#allocation5 + $0x28] sm:$0xf]
    %v149 = vld [vmem:[#allocation5 + $0x2c] sm:$0xf]
    %v150 = vld [vmem:[#allocation5 + $0x30] sm:$0xf]
    %v151 = vld [vmem:[#allocation5 + $0x34] sm:$0xf]
    %v152 = vld [vmem:[#allocation5 + $0x38] sm:$0xf]
    %v153 = vld [vmem:[#allocation5 + $0x3c] sm:$0xf]
    %v154 = vld [vmem:[%s4] sm:$0x1]
    %v156 = vlaneseq
    %v157 = vshrl.u32 %v156, 7
    %v158 = vsub.s32 0, %v157
    %v159 = vrot.slane %v154, %v158
    %v177 = vunpack.c.l.b16 %v138
    %v178 = vunpack.c.l.b16 %v139
    %v179 = vunpack.c.l.b16 %v140
    %v180 = vunpack.c.l.b16 %v141
    %v181 = vunpack.c.l.b16 %v142
    %v182 = vunpack.c.l.b16 %v143
    %v183 = vunpack.c.l.b16 %v144
    %v184 = vunpack.c.l.b16 %v145
    %v185 = vunpack.c.l.b16 %v146
    %v186 = vunpack.c.l.b16 %v147
    %v187 = vunpack.c.l.b16 %v148
    %v188 = vunpack.c.l.b16 %v149
    %v189 = vunpack.c.l.b16 %v150
    %v190 = vunpack.c.l.b16 %v151
    %v191 = vunpack.c.l.b16 %v152
    %v192 = vunpack.c.l.b16 %v153
    %v193 = vpack.c.b16 %v178, %v177
    %v194 = vpack.c.b16 %v180, %v179
    %v195 = vpack.c.b16 %v182, %v181
    %v196 = vpack.c.b16 %v184, %v183
    %v197 = vpack.c.b16 %v186, %v185
    %v198 = vpack.c.b16 %v188, %v187
    %v199 = vpack.c.b16 %v190, %v189
    %v200 = vpack.c.b16 %v192, %v191
    %209 = vmatprep.subr.bf16.mxu0 0
    %210 = vmatpush1.bf16.msra.mxu0 %v200
    %211 = vmatprep.subr.bf16.mxu0 0
    %212 = vmatpush1.bf16.msra.mxu0 %v199
    %213 = vmatprep.subr.bf16.mxu0 0
    %214 = vmatpush1.bf16.msra.mxu0 %v198
    %215 = vmatprep.subr.bf16.mxu0 0
    %216 = vmatpush1.bf16.msra.mxu0 %v197
    %217 = vmatprep.subr.bf16.mxu0 0
    %218 = vmatpush1.bf16.msra.mxu0 %v196
    %219 = vmatprep.subr.bf16.mxu0 0
    %220 = vmatpush1.bf16.msra.mxu0 %v195
    %221 = vmatprep.subr.bf16.mxu0 0
    %222 = vmatpush1.bf16.msra.mxu0 %v194
    %223 = vmatprep.subr.bf16.mxu0 0
    %224 = vmatpush1.bf16.msra.mxu0 %v193
    %225 = vmatprep.subr.bf16.mxu0 0
    %226 = vmatpush2.bf16.msra.mxu0 0
    %227 = vmatprep.subr.bf16.mxu0 0
    %228 = vmatpush2.bf16.msra.mxu0 0
    %229 = vmatprep.subr.bf16.mxu0 0
    %230 = vmatpush2.bf16.msra.mxu0 0
    %231 = vmatprep.subr.bf16.mxu0 0
    %232 = vmatpush2.bf16.msra.mxu0 0
    %233 = vmatprep.subr.bf16.mxu0 0
    %234 = vmatpush2.bf16.msra.mxu0 0
    %235 = vmatprep.subr.bf16.mxu0 0
    %236 = vmatpush2.bf16.msra.mxu0 0
    %237 = vmatprep.subr.bf16.mxu0 0
    %238 = vmatpush2.bf16.msra.mxu0 0
    %239 = vmatprep.subr.bf16.mxu0 0
    %240 = vmatpush2.bf16.msra.mxu0 0
    %241 = vmatprep.mubr.bf16.mxu0 0
    %242 = vmatmul.mubr.bf16.gmra.mxu0 %v137
    %v243 = vpop.f32.mrf.mxu0
    %v244 = vadd.f32 %v159, %v243
    %v245 = vpop.f32.mrf.mxu0
    %v246 = vpop.f32.mrf.mxu0
    %v247 = vpop.f32.mrf.mxu0
    %248 = vdwg.mxu0
    %v249 = vmax.f32 %v244, 0.0
    %v250 = vpack.c.bf16 %v249, %v249
    %v251 = vld [vmem:[#allocation7] sm:$0xf]
    %v252 = vld [vmem:[#allocation7 + $0x4] sm:$0xf]
    %v253 = vld [vmem:[#allocation7 + $0x8] sm:$0xf]
    %v254 = vld [vmem:[#allocation7 + $0xc] sm:$0xf]
    %v255 = vld [vmem:[#allocation7 + $0x10] sm:$0xf]
    %v256 = vld [vmem:[#allocation7 + $0x14] sm:$0xf]
    %v257 = vld [vmem:[#allocation7 + $0x18] sm:$0xf]
    %v258 = vld [vmem:[#allocation7 + $0x1c] sm:$0xf]
    %v259 = vld [vmem:[#allocation7 + $0x20] sm:$0xf]
    %v260 = vld [vmem:[#allocation7 + $0x24] sm:$0xf]
    %v261 = vld [vmem:[#allocation7 + $0x28] sm:$0xf]
    %v262 = vld [vmem:[#allocation7 + $0x2c] sm:$0xf]
    %v263 = vld [vmem:[#allocation7 + $0x30] sm:$0xf]
    %v264 = vld [vmem:[#allocation7 + $0x34] sm:$0xf]
    %v265 = vld [vmem:[#allocation7 + $0x38] sm:$0xf]
    %v266 = vld [vmem:[#allocation7 + $0x3c] sm:$0xf]
    %v267 = vld [vmem:[%s6] sm:$0x1]
    %v269 = vlaneseq
    %v270 = vshrl.u32 %v269, 7
    %v271 = vsub.s32 0, %v270
    %v272 = vrot.slane %v267, %v271
    %v290 = vunpack.c.l.b16 %v251
    %v291 = vunpack.c.l.b16 %v252
    %v292 = vunpack.c.l.b16 %v253
    %v293 = vunpack.c.l.b16 %v254
    %v294 = vunpack.c.l.b16 %v255
    %v295 = vunpack.c.l.b16 %v256
    %v296 = vunpack.c.l.b16 %v257
    %v297 = vunpack.c.l.b16 %v258
    %v298 = vunpack.c.l.b16 %v259
    %v299 = vunpack.c.l.b16 %v260
    %v300 = vunpack.c.l.b16 %v261
    %v301 = vunpack.c.l.b16 %v262
    %v302 = vunpack.c.l.b16 %v263
    %v303 = vunpack.c.l.b16 %v264
    %v304 = vunpack.c.l.b16 %v265
    %v305 = vunpack.c.l.b16 %v266
    %v306 = vpack.c.b16 %v291, %v290
    %v307 = vpack.c.b16 %v293, %v292
    %v308 = vpack.c.b16 %v295, %v294
    %v309 = vpack.c.b16 %v297, %v296
    %v310 = vpack.c.b16 %v299, %v298
    %v311 = vpack.c.b16 %v301, %v300
    %v312 = vpack.c.b16 %v303, %v302
    %v313 = vpack.c.b16 %v305, %v304
    %322 = vmatprep.subr.bf16.mxu0 0
    %323 = vmatpush1.bf16.msra.mxu0 %v313
    %324 = vmatprep.subr.bf16.mxu0 0
    %325 = vmatpush1.bf16.msra.mxu0 %v312
    %326 = vmatprep.subr.bf16.mxu0 0
    %327 = vmatpush1.bf16.msra.mxu0 %v311
    %328 = vmatprep.subr.bf16.mxu0 0
    %329 = vmatpush1.bf16.msra.mxu0 %v310
    %330 = vmatprep.subr.bf16.mxu0 0
    %331 = vmatpush1.bf16.msra.mxu0 %v309
    %332 = vmatprep.subr.bf16.mxu0 0
    %333 = vmatpush1.bf16.msra.mxu0 %v308
    %334 = vmatprep.subr.bf16.mxu0 0
    %335 = vmatpush1.bf16.msra.mxu0 %v307
    %336 = vmatprep.subr.bf16.mxu0 0
    %337 = vmatpush1.bf16.msra.mxu0 %v306
    %338 = vmatprep.subr.bf16.mxu0 0
    %339 = vmatpush2.bf16.msra.mxu0 0
    %340 = vmatprep.subr.bf16.mxu0 0
    %341 = vmatpush2.bf16.msra.mxu0 0
    %342 = vmatprep.subr.bf16.mxu0 0
    %343 = vmatpush2.bf16.msra.mxu0 0
    %344 = vmatprep.subr.bf16.mxu0 0
    %345 = vmatpush2.bf16.msra.mxu0 0
    %346 = vmatprep.subr.bf16.mxu0 0
    %347 = vmatpush2.bf16.msra.mxu0 0
    %348 = vmatprep.subr.bf16.mxu0 0
    %349 = vmatpush2.bf16.msra.mxu0 0
    %350 = vmatprep.subr.bf16.mxu0 0
    %351 = vmatpush2.bf16.msra.mxu0 0
    %352 = vmatprep.subr.bf16.mxu0 0
    %353 = vmatpush2.bf16.msra.mxu0 0
    %354 = vmatprep.mubr.bf16.mxu0 0
    %355 = vmatmul.mubr.bf16.gmra.mxu0 %v250
    %v356 = vpop.f32.mrf.mxu0
    %v357 = vadd.f32 %v272, %v356
    %v358 = vpop.f32.mrf.mxu0
    %v359 = vpop.f32.mrf.mxu0
    %v360 = vpop.f32.mrf.mxu0
    %361 = vdwg.mxu0
    %v362 = vtanh.pop %v357
    %363 = vst [vmem:[#allocation8] sm:$0xff] %v362
    // Predicated region
    $region42: #{ddpg_actor_forward.1} parent=1 // pred_check
      _
    $region43: #{ddpg_actor_forward.1} parent=1 // pred_check_branch
      %365 = sbr.rel (0) target = $region45
    $region44: #{ddpg_actor_forward.1} parent=1 // pred_region
      %s367 = ssub.s32 128, 128
      %368 = vsyncadd [#allocation4], %s367
      %s370 = sshll.u32 [#allocation8], 4
      %s371 = int_to_ptr.vmem [resolvable:$true] %s370
      %373 = dma.vmem_to_hbm [thread:$0]  %s371, 128, %s7, [#allocation4]
    $region45: #{ddpg_actor_forward.1} parent=1 // pred_fallthru
      _
    // Predicated region
    $region46: #{ddpg_actor_forward.1} parent=1 // pred_check
      _
    $region47: #{ddpg_actor_forward.1} parent=1 // pred_check_branch
      %375 = sbr.rel (0) target = $region49
    $region48: #{ddpg_actor_forward.1} parent=1 // pred_region
      %376 = dma.done [#allocation4], 128
    $region49: #{ddpg_actor_forward.1} parent=1 // pred_fallthru
      _
    %377 = vsyncpa [#allocation3], 1
    %378 = vsyncpa [#allocation6], 1
    %379 = vsyncpa [#allocation4], 1

</llo_original>
